<compile_context>
chip_gen: v7x
topology: tpu7x:2x2x1
jax: 0.10.0
libtpu: 0.0.40
codegen_flags: <defaults>
</compile_context>

<pallas_src>
import jax
import jax.numpy as jnp
from jax.experimental import pallas as pl
from jax.experimental.pallas import tpu as pltpu


def _round_up(x, m):
    return ((x + m - 1) // m) * m


def regression_head_kernel(x_ref, w1_ref, b1_ref, w2_ref, b2_ref, o_ref):
    # x: [TB, H]  w1: [H, H]  b1: [1, H]  w2: [H, L]  b2: [1, L]  o: [TB, L]
    # TODO(synk): dropout is identity in eval mode; training-mode dropout
    # (pltpu.prng_random_bits mask) is intentionally omitted.
    # MXU dots in the operands' native dtype (bf16-friendly), f32 accumulation.
    h = jnp.dot(x_ref[...], w1_ref[...], preferred_element_type=jnp.float32)
    h = jnp.tanh(h + b1_ref[...].astype(jnp.float32))        # f32 bias + EUP tanh
    y = jnp.dot(h.astype(w2_ref.dtype), w2_ref[...],
                preferred_element_type=jnp.float32)
    y = y + b2_ref[...].astype(jnp.float32)
    o_ref[...] = y.astype(o_ref.dtype)


def regression_head(features, w_dense, b_dense, w_out, b_out, *, block_b=512):
    """features: [B, H]; w_dense: [H, H]; b_dense: [H]; w_out: [H, L]; b_out: [L]."""
    B, H = features.shape
    L = w_out.shape[1]
    dt = features.dtype

    # --- batch tile selection -------------------------------------------------
    # Multiple of 8 (sublane granularity).  When the batch is big enough, make
    # sure there are at least 2 grid steps so the "parallel" axis can shard
    # across both TensorCores on v7x; cap at block_b so per-step data stays
    # comfortably within VMEM while amortizing the ~0.35us per-step overhead.
    Bp8 = _round_up(max(B, 1), 8)
    if Bp8 >= 16:
        TB = min(block_b, _round_up(pl.cdiv(Bp8, 2), 8))
    else:
        TB = Bp8
    Bp = _round_up(B, TB)

    # Only the activation is (possibly) padded, and only along batch.
    x = features
    if Bp != B:
        x = jnp.zeros((Bp, H), dt).at[:B, :].set(features)

    # Biases as (1, N) rows for a broadcasted add (tiny reshape, no padding).
    b1 = b_dense.reshape(1, H)
    b2 = b_out.reshape(1, L)

    # --- resident-weight guard (only kicks in when H/L are large) ------------
    itemsize = jnp.dtype(w_dense.dtype).itemsize
    weight_bytes = (H * H + H * L + H + L) * itemsize
    resident_big = weight_bytes > (4 << 20)
    # Constant-index blocks never change, so a second buffer is pure waste
    # once the footprint is large (matters on v7x's 64 MiB VMEM).
    wspec_kw = dict(pipeline_mode=pl.Buffered(1)) if resident_big else {}

    cp_kw = dict(dimension_semantics=("parallel",))
    if resident_big:
        act_bytes = 2 * TB * (H + L) * jnp.dtype(dt).itemsize  # double-buffered x/o
        cp_kw["vmem_limit_bytes"] = min(int(weight_bytes + act_bytes) + (8 << 20),
                                        100 << 20)

    # Cost estimate from the true dims the kernel processes.
    bytes_accessed = (
        B * H * jnp.dtype(dt).itemsize          # activations in
        + weight_bytes                          # weights + biases
        + B * L * jnp.dtype(dt).itemsize        # output
    )
    cost = pl.CostEstimate(
        flops=2 * B * H * H + 2 * B * H * L,
        transcendentals=B * H,
        bytes_accessed=bytes_accessed,
    )

    out = pl.pallas_call(
        regression_head_kernel,
        out_shape=jax.ShapeDtypeStruct((Bp, L), dt),
        grid=(Bp // TB,),
        in_specs=[
            pl.BlockSpec((TB, H), lambda i: (i, 0)),              # x: tiled over batch
            pl.BlockSpec((H, H), lambda i: (0, 0), **wspec_kw),   # dense weight (resident)
            pl.BlockSpec((1, H), lambda i: (0, 0), **wspec_kw),   # dense bias
            pl.BlockSpec((H, L), lambda i: (0, 0), **wspec_kw),   # out_proj weight (resident)
            pl.BlockSpec((1, L), lambda i: (0, 0), **wspec_kw),   # out_proj bias
        ],
        out_specs=pl.BlockSpec((TB, L), lambda i: (i, 0)),
        compiler_params=pltpu.CompilerParams(**cp_kw),
        cost_estimate=cost,
    )(x, w_dense, b1, w_out, b2)

    return out if Bp == B else out[:B, :]


if __name__ == "__main__":
    # config: hidden_size=32, num_labels=4, batch=8
    B, H, L = 8, 32, 4
    key = jax.random.PRNGKey(0)
    kx, kw1, kb1, kw2, kb2 = jax.random.split(key, 5)

    features = jax.random.normal(kx, (B, H), dtype=jnp.float32)
    # PyTorch nn.Linear stores weight as (out, in); we keep the transposed
    # (in, out) layout so the kernel does x @ W.
    w_dense = jax.random.normal(kw1, (H, H), dtype=jnp.float32) * 0.05
    b_dense = jax.random.normal(kb1, (H,), dtype=jnp.float32) * 0.05
    w_out = jax.random.normal(kw2, (H, L), dtype=jnp.float32) * 0.05
    b_out = jax.random.normal(kb2, (L,), dtype=jnp.float32) * 0.05

    def ref_fn(f):
        return jnp.tanh(f @ w_dense + b_dense) @ w_out + b_out

    # check 1: small batch (single grid step)
    out = jax.block_until_ready(
        regression_head(features, w_dense, b_dense, w_out, b_out))
    assert out.shape == (B, L)
    assert jnp.allclose(out, ref_fn(features), atol=1e-5, rtol=1e-5)

    # check 2: batch large enough for a multi-step "parallel" grid (2 tiles)
    B2 = 256
    feats2 = jax.random.normal(jax.random.PRNGKey(1), (B2, H), dtype=jnp.float32)
    out2 = jax.block_until_ready(
        regression_head(feats2, w_dense, b_dense, w_out, b_out))
    assert out2.shape == (B2, L)
    assert jnp.allclose(out2, ref_fn(feats2), atol=1e-5, rtol=1e-5)

    # check 3: ragged batch exercising the batch-pad + slice path
    B3 = 20
    feats3 = jax.random.normal(jax.random.PRNGKey(2), (B3, H), dtype=jnp.float32)
    out3 = jax.block_until_ready(
        regression_head(feats3, w_dense, b_dense, w_out, b_out))
    assert out3.shape == (B3, L)
    assert jnp.allclose(out3, ref_fn(feats3), atol=1e-5, rtol=1e-5)

    print("KERNEL_OK")
</pallas_src>

<mosaic_0001>
module attributes {stable_mosaic.version = 11 : i64} {
  func.func @regression_head_kernel(%arg0: i32, %arg1: memref<8x32xf32, #tpu.memory_space<vmem>>, %arg2: memref<32x32xf32, #tpu.memory_space<vmem>>, %arg3: memref<1x32xf32, #tpu.memory_space<vmem>>, %arg4: memref<32x4xf32, #tpu.memory_space<vmem>>, %arg5: memref<1x4xf32, #tpu.memory_space<vmem>>, %arg6: memref<8x4xf32, #tpu.memory_space<vmem>>) attributes {dimension_semantics = [#tpu.dimension_semantics<parallel>], iteration_bounds = array<i64: 1>, scalar_prefetch = 0 : i64, scratch_operands = 0 : i64, tpu.core_type = #tpu.core_type<tc>, window_params = [{transform_indices = @transform_0, window_bounds = array<i64: 8, 32>}, {pipeline_mode = #tpu.pipeline_mode<synchronous>, transform_indices = @transform_1, window_bounds = array<i64: 32, 32>}, {pipeline_mode = #tpu.pipeline_mode<synchronous>, transform_indices = @transform_2, window_bounds = array<i64: 1, 32>}, {pipeline_mode = #tpu.pipeline_mode<synchronous>, transform_indices = @transform_3, window_bounds = array<i64: 32, 4>}, {pipeline_mode = #tpu.pipeline_mode<synchronous>, transform_indices = @transform_4, window_bounds = array<i64: 1, 4>}, {transform_indices = @transform_5, window_bounds = array<i64: 8, 4>}]} {
    %c0 = arith.constant 0 : index
    %c0_0 = arith.constant 0 : index
    %0 = vector.load %arg1[%c0, %c0_0] : memref<8x32xf32, #tpu.memory_space<vmem>>, vector<8x32xf32>
    %c0_1 = arith.constant 0 : index
    %c0_2 = arith.constant 0 : index
    %1 = vector.load %arg2[%c0_1, %c0_2] : memref<32x32xf32, #tpu.memory_space<vmem>>, vector<32x32xf32>
    %cst = arith.constant dense<0.000000e+00> : vector<8x32xf32>
    %2 = tpu.matmul %0, %1, %cst {dimension_numbers = #tpu.dot_dimension_numbers<[1], [0], [0], [1], [0, 0, 1, 1], [], []>} : vector<8x32xf32>, vector<32x32xf32>, vector<8x32xf32> -> vector<8x32xf32>
    %c0_3 = arith.constant 0 : index
    %c0_4 = arith.constant 0 : index
    %3 = vector.load %arg3[%c0_3, %c0_4] : memref<1x32xf32, #tpu.memory_space<vmem>>, vector<1x32xf32>
    %4 = vector.broadcast %3 : vector<1x32xf32> to vector<8x32xf32>
    %5 = arith.addf %2, %4 : vector<8x32xf32>
    %6 = math.tanh %5 : vector<8x32xf32>
    %c0_5 = arith.constant 0 : index
    %c0_6 = arith.constant 0 : index
    %7 = vector.load %arg4[%c0_5, %c0_6] : memref<32x4xf32, #tpu.memory_space<vmem>>, vector<32x4xf32>
    %cst_7 = arith.constant dense<0.000000e+00> : vector<8x4xf32>
    %8 = tpu.matmul %6, %7, %cst_7 {dimension_numbers = #tpu.dot_dimension_numbers<[1], [0], [0], [1], [0, 0, 1, 1], [], []>} : vector<8x32xf32>, vector<32x4xf32>, vector<8x4xf32> -> vector<8x4xf32>
    %c0_8 = arith.constant 0 : index
    %c0_9 = arith.constant 0 : index
    %9 = vector.load %arg5[%c0_8, %c0_9] : memref<1x4xf32, #tpu.memory_space<vmem>>, vector<1x4xf32>
    %10 = vector.broadcast %9 : vector<1x4xf32> to vector<8x4xf32>
    %11 = arith.addf %8, %10 : vector<8x4xf32>
    %c0_10 = arith.constant 0 : index
    %c0_11 = arith.constant 0 : index
    %12 = vector.load %arg6[%c0_10, %c0_11] : memref<8x4xf32, #tpu.memory_space<vmem>>, vector<8x4xf32>
    tpu.vector_store %arg6[%c0_10, %c0_11], %11 {strides = array<i32>} : memref<8x4xf32, #tpu.memory_space<vmem>>, vector<8x4xf32>,
    return
  }
  func.func @transform_0(%arg0: i32) -> (i32, i32) {
    %c0_i32 = arith.constant 0 : i32
    %c0_i32_0 = arith.constant 0 : i32
    return %arg0, %c0_i32 : i32, i32
  }
  func.func @transform_1(%arg0: i32) -> (i32, i32) {
    %c0_i32 = arith.constant 0 : i32
    %c0_i32_0 = arith.constant 0 : i32
    %c0_i32_1 = arith.constant 0 : i32
    return %c0_i32, %c0_i32_0 : i32, i32
  }
  func.func @transform_2(%arg0: i32) -> (i32, i32) {
    %c0_i32 = arith.constant 0 : i32
    %c0_i32_0 = arith.constant 0 : i32
    %c0_i32_1 = arith.constant 0 : i32
    return %c0_i32, %c0_i32_0 : i32, i32
  }
  func.func @transform_3(%arg0: i32) -> (i32, i32) {
    %c0_i32 = arith.constant 0 : i32
    %c0_i32_0 = arith.constant 0 : i32
    %c0_i32_1 = arith.constant 0 : i32
    return %c0_i32, %c0_i32_0 : i32, i32
  }
  func.func @transform_4(%arg0: i32) -> (i32, i32) {
    %c0_i32 = arith.constant 0 : i32
    %c0_i32_0 = arith.constant 0 : i32
    %c0_i32_1 = arith.constant 0 : i32
    return %c0_i32, %c0_i32_0 : i32, i32
  }
  func.func @transform_5(%arg0: i32) -> (i32, i32) {
    %c0_i32 = arith.constant 0 : i32
    %c0_i32_0 = arith.constant 0 : i32
    return %arg0, %c0_i32 : i32, i32
  }
}

</mosaic_0001>

<llo_original>
// kernel: tpu_custom_call.1
$region0: #{tpu_custom_call.1}
  #allocation0 [shape = 'u32[]', space=smem, size = 0x4, offset = 0x4, fixed_abs, tag = 'smem constant byte address 0x4 - core index']
  #allocation1 [shape = 'u32[144,128]{1,0:T(1,128)}', space=vmem, size = 0x12000, scoped, tag = 'internal scratch']
  %s0 = inlined_call_operand.hbm [shape: f32[8,32], index: 0, kind: input, shape index: {}]
  %s1 = inlined_call_operand.vmem [shape: f32[32,32], index: 1, kind: input, shape index: {}]
  %s2 = inlined_call_operand.vmem [shape: f32[1,32], index: 2, kind: input, shape index: {}]
  %s3 = inlined_call_operand.vmem [shape: f32[32,4], index: 3, kind: input, shape index: {}]
  %s4 = inlined_call_operand.vmem [shape: f32[1,4], index: 4, kind: input, shape index: {}]
  %s5 = inlined_call_operand.vmem [shape: f32[8,4], index: 5, kind: output, shape index: {}]
  %s6 = sld [smem:[#allocation0]]
  $region34: #{tpu_custom_call.1} parent=0
    _
  %s8 = ssub.s32 1, %s6
  %s9 = scalar_select 0, %s8, %s6
  $region1: #{tpu_custom_call.1} parent=0
    #allocation2 [shape = 'u8[4096]{0}', space=vmem, size = 0x1000, scoped, tag = 'input window, operand 0, single buffered']
    #allocation3 [shape = 's32[1]{0}', space=sflag, size = 0x4, scoped, tag = 'scoped memory for tpu_custom_call.1']
    %10 = vsyncpa [#allocation3], 0
    // Predicated region
    $region2: #{tpu_custom_call.1} parent=1 // pred_check
      _
    $region3: #{tpu_custom_call.1} parent=1 // pred_check_branch
      %12 = sbr.rel (0) target = $region5
    $region4: #{tpu_custom_call.1} parent=1 // pred_region
      %s14 = ssub.s32 128, 128
      %15 = vsyncadd [#allocation3], %s14
      %s17 = sshll.u32 [#allocation2], 4
      %s18 = int_to_ptr.vmem [resolvable:$true] %s17
      %20 = dma.hbm_to_vmem [thread:$0]  %s0, 128, %s18, [#allocation3]
    $region5: #{tpu_custom_call.1} parent=1 // pred_fallthru
      _
    // Predicated region
    $region6: #{tpu_custom_call.1} parent=1 // pred_check
      _
    $region7: #{tpu_custom_call.1} parent=1 // pred_check_branch
      %22 = sbr.rel (0) target = $region9
    $region8: #{tpu_custom_call.1} parent=1 // pred_region
      _
    $region9: #{tpu_custom_call.1} parent=1 // pred_fallthru
      _
    // Predicated region
    $region10: #{tpu_custom_call.1} parent=1 // pred_check
      _
    $region11: #{tpu_custom_call.1} parent=1 // pred_check_branch
      %24 = sbr.rel (0) target = $region13
    $region12: #{tpu_custom_call.1} parent=1 // pred_region
      _
    $region13: #{tpu_custom_call.1} parent=1 // pred_fallthru
      _
    // Predicated region
    $region14: #{tpu_custom_call.1} parent=1 // pred_check
      _
    $region15: #{tpu_custom_call.1} parent=1 // pred_check_branch
      %26 = sbr.rel (0) target = $region17
    $region16: #{tpu_custom_call.1} parent=1 // pred_region
      _
    $region17: #{tpu_custom_call.1} parent=1 // pred_fallthru
      _
    // Predicated region
    $region18: #{tpu_custom_call.1} parent=1 // pred_check
      _
    $region19: #{tpu_custom_call.1} parent=1 // pred_check_branch
      %28 = sbr.rel (0) target = $region21
    $region20: #{tpu_custom_call.1} parent=1 // pred_region
      _
    $region21: #{tpu_custom_call.1} parent=1 // pred_fallthru
      _
    // Predicated region
    $region22: #{tpu_custom_call.1} parent=1 // pred_check
      _
    $region23: #{tpu_custom_call.1} parent=1 // pred_check_branch
      %30 = sbr.rel (0) target = $region25
    $region24: #{tpu_custom_call.1} parent=1 // pred_region
      %31 = dma.done [#allocation3], 128
    $region25: #{tpu_custom_call.1} parent=1 // pred_fallthru
      _
    %v32 = vld [vmem:[#allocation2] sm:$0xff]
    %v33 = vld [vmem:[%s1] sm:$0xff]
    %v34 = vld [vmem:[%s1 + $0x8] sm:$0xff]
    %v35 = vld [vmem:[%s1 + $0x10] sm:$0xff]
    %v36 = vld [vmem:[%s1 + $0x18] sm:$0xff]
    %v37 = vld [vmem:[%s2] sm:$0x1]
    %v39 = vlaneseq
    %v40 = vshrl.u32 %v39, 7
    %v41 = vsub.s32 0, %v40
    %v42 = vrot.slane %v37, %v41
    %vm44 = vcmask 261120
    %v46 = vsel %vm44, %v32, 0
    %48 = vmatprep.subr.mxu0 0.0
    %49 = vmatpush1.msra.mxu0 %v33
    %50 = vmatprep.subr.mxu0 0.0
    %51 = vmatpush1.msra.mxu0 %v34
    %52 = vmatprep.subr.mxu0 0.0
    %53 = vmatpush1.msra.mxu0 %v35
    %54 = vmatprep.subr.mxu0 0.0
    %55 = vmatpush1.msra.mxu0 %v36
    %56 = vmatprep.subr.mxu0 0.0
    %57 = vmatpush1.msra.mxu0 0.0
    %58 = vmatprep.subr.mxu0 0.0
    %59 = vmatpush1.msra.mxu0 0.0
    %60 = vmatprep.subr.mxu0 0.0
    %61 = vmatpush1.msra.mxu0 0.0
    %62 = vmatprep.subr.mxu0 0.0
    %63 = vmatpush1.msra.mxu0 0.0
    %64 = vmatprep.subr.mxu0 0.0
    %65 = vmatpush1.msra.mxu0 0.0
    %66 = vmatprep.subr.mxu0 0.0
    %67 = vmatpush1.msra.mxu0 0.0
    %68 = vmatprep.subr.mxu0 0.0
    %69 = vmatpush1.msra.mxu0 0.0
    %70 = vmatprep.subr.mxu0 0.0
    %71 = vmatpush1.msra.mxu0 0.0
    %72 = vmatprep.subr.mxu0 0.0
    %73 = vmatpush1.msra.mxu0 0.0
    %74 = vmatprep.subr.mxu0 0.0
    %75 = vmatpush1.msra.mxu0 0.0
    %76 = vmatprep.subr.mxu0 0.0
    %77 = vmatpush1.msra.mxu0 0.0
    %78 = vmatprep.subr.mxu0 0.0
    %79 = vmatpush1.msra.mxu0 0.0
    %80 = vmatprep.subr.mxu0 0.0
    %81 = vmatpush1.msra.mxu0 0.0
    %82 = vmatprep.subr.mxu0 0.0
    %83 = vmatpush1.msra.mxu0 0.0
    %84 = vmatprep.subr.mxu0 0.0
    %85 = vmatpush1.msra.mxu0 0.0
    %86 = vmatprep.subr.mxu0 0.0
    %87 = vmatpush1.msra.mxu0 0.0
    %88 = vmatprep.subr.mxu0 0.0
    %89 = vmatpush1.msra.mxu0 0.0
    %90 = vmatprep.subr.mxu0 0.0
    %91 = vmatpush1.msra.mxu0 0.0
    %92 = vmatprep.subr.mxu0 0.0
    %93 = vmatpush1.msra.mxu0 0.0
    %94 = vmatprep.subr.mxu0 0.0
    %95 = vmatpush1.msra.mxu0 0.0
    %96 = vmatprep.subr.mxu0 0.0
    %97 = vmatpush1.msra.mxu0 0.0
    %98 = vmatprep.subr.mxu0 0.0
    %99 = vmatpush1.msra.mxu0 0.0
    %100 = vmatprep.subr.mxu0 0.0
    %101 = vmatpush1.msra.mxu0 0.0
    %102 = vmatprep.subr.mxu0 0.0
    %103 = vmatpush1.msra.mxu0 0.0
    %104 = vmatprep.subr.mxu0 0.0
    %105 = vmatpush1.msra.mxu0 0.0
    %106 = vmatprep.subr.mxu0 0.0
    %107 = vmatpush1.msra.mxu0 0.0
    %108 = vmatprep.subr.mxu0 0.0
    %109 = vmatpush1.msra.mxu0 0.0
    %110 = vmatprep.subr.mxu0 0.0
    %111 = vmatpush1.msra.mxu0 0.0
    %112 = vmatprep.mubr.f32.mxu0 0.0
    %113 = vmatmul.mubr.f32.gmra.mrb[0].mxu0 %v46
    %v114 = vpop.f32.mrb[0].mxu0
    %v115 = vadd.f32 %v42, %v114
    %v116 = vpop.f32.mrb[0].mxu0
    %117 = vdwg.mxu0
    %v118 = vtanh.pop %v115
    %v119 = vld [vmem:[%s3] sm:$0xff]
    %v120 = vld [vmem:[%s3 + $0x8] sm:$0xff]
    %v121 = vld [vmem:[%s3 + $0x10] sm:$0xff]
    %v122 = vld [vmem:[%s3 + $0x18] sm:$0xff]
    %v123 = vld [vmem:[%s4] sm:$0x1]
    %v125 = vlaneseq
    %v126 = vshrl.u32 %v125, 7
    %v127 = vsub.s32 0, %v126
    %v128 = vrot.slane %v123, %v127
    %v131 = vsel %vm44, %v118, 0
    %133 = vmatprep.subr.mxu0 0.0
    %134 = vmatpush1.msra.mxu0 %v119
    %135 = vmatprep.subr.mxu0 0.0
    %136 = vmatpush1.msra.mxu0 %v120
    %137 = vmatprep.subr.mxu0 0.0
    %138 = vmatpush1.msra.mxu0 %v121
    %139 = vmatprep.subr.mxu0 0.0
    %140 = vmatpush1.msra.mxu0 %v122
    %141 = vmatprep.subr.mxu0 0.0
    %142 = vmatpush1.msra.mxu0 0.0
    %143 = vmatprep.subr.mxu0 0.0
    %144 = vmatpush1.msra.mxu0 0.0
    %145 = vmatprep.subr.mxu0 0.0
    %146 = vmatpush1.msra.mxu0 0.0
    %147 = vmatprep.subr.mxu0 0.0
    %148 = vmatpush1.msra.mxu0 0.0
    %149 = vmatprep.subr.mxu0 0.0
    %150 = vmatpush1.msra.mxu0 0.0
    %151 = vmatprep.subr.mxu0 0.0
    %152 = vmatpush1.msra.mxu0 0.0
    %153 = vmatprep.subr.mxu0 0.0
    %154 = vmatpush1.msra.mxu0 0.0
    %155 = vmatprep.subr.mxu0 0.0
    %156 = vmatpush1.msra.mxu0 0.0
    %157 = vmatprep.subr.mxu0 0.0
    %158 = vmatpush1.msra.mxu0 0.0
    %159 = vmatprep.subr.mxu0 0.0
    %160 = vmatpush1.msra.mxu0 0.0
    %161 = vmatprep.subr.mxu0 0.0
    %162 = vmatpush1.msra.mxu0 0.0
    %163 = vmatprep.subr.mxu0 0.0
    %164 = vmatpush1.msra.mxu0 0.0
    %165 = vmatprep.subr.mxu0 0.0
    %166 = vmatpush1.msra.mxu0 0.0
    %167 = vmatprep.subr.mxu0 0.0
    %168 = vmatpush1.msra.mxu0 0.0
    %169 = vmatprep.subr.mxu0 0.0
    %170 = vmatpush1.msra.mxu0 0.0
    %171 = vmatprep.subr.mxu0 0.0
    %172 = vmatpush1.msra.mxu0 0.0
    %173 = vmatprep.subr.mxu0 0.0
    %174 = vmatpush1.msra.mxu0 0.0
    %175 = vmatprep.subr.mxu0 0.0
    %176 = vmatpush1.msra.mxu0 0.0
    %177 = vmatprep.subr.mxu0 0.0
    %178 = vmatpush1.msra.mxu0 0.0
    %179 = vmatprep.subr.mxu0 0.0
    %180 = vmatpush1.msra.mxu0 0.0
    %181 = vmatprep.subr.mxu0 0.0
    %182 = vmatpush1.msra.mxu0 0.0
    %183 = vmatprep.subr.mxu0 0.0
    %184 = vmatpush1.msra.mxu0 0.0
    %185 = vmatprep.subr.mxu0 0.0
    %186 = vmatpush1.msra.mxu0 0.0
    %187 = vmatprep.subr.mxu0 0.0
    %188 = vmatpush1.msra.mxu0 0.0
    %189 = vmatprep.subr.mxu0 0.0
    %190 = vmatpush1.msra.mxu0 0.0
    %191 = vmatprep.subr.mxu0 0.0
    %192 = vmatpush1.msra.mxu0 0.0
    %193 = vmatprep.subr.mxu0 0.0
    %194 = vmatpush1.msra.mxu0 0.0
    %195 = vmatprep.subr.mxu0 0.0
    %196 = vmatpush1.msra.mxu0 0.0
    %197 = vmatprep.mubr.f32.mxu0 0.0
    %198 = vmatmul.mubr.f32.gmra.mrb[0].mxu0 %v131
    %v199 = vpop.f32.mrb[0].mxu0
    %v200 = vadd.f32 %v128, %v199
    %v201 = vpop.f32.mrb[0].mxu0
    %202 = vdwg.mxu0
    %vm203 = vcmask 31744
    %204 = vst.msk [vmem:[%s5] sm:$0xff] %vm203, %v200
    // Predicated region
    $region26: #{tpu_custom_call.1} parent=1 // pred_check
      _
    $region27: #{tpu_custom_call.1} parent=1 // pred_check_branch
      %206 = sbr.rel (0) target = $region29
    $region28: #{tpu_custom_call.1} parent=1 // pred_region
      _
    $region29: #{tpu_custom_call.1} parent=1 // pred_fallthru
      _
    // Predicated region
    $region30: #{tpu_custom_call.1} parent=1 // pred_check
      _
    $region31: #{tpu_custom_call.1} parent=1 // pred_check_branch
      %208 = sbr.rel (0) target = $region33
    $region32: #{tpu_custom_call.1} parent=1 // pred_region
      _
    $region33: #{tpu_custom_call.1} parent=1 // pred_fallthru
      _
    %209 = vsyncpa [#allocation3], 1

</llo_original>
